<compile_context>
chip_gen: v5e
topology: v5e:2x2
jax: 0.10.0
libtpu: 0.0.40
codegen_flags: <defaults>
</compile_context>

<pallas_src>
import jax
import jax.numpy as jnp
from jax import lax
from jax.experimental import pallas as pl
from jax.experimental.pallas import tpu as pltpu


def _mahalanobis_mask_kernel(xf_ref, a_ref, u_ref, out_ref):
    # xf_ref : (TB, C, F)  f32   per-block batch of |rfft| magnitudes
    # a_ref  : (F, F)      f32   shared Mahalanobis parameter
    # u_ref  : (TB, C, C)  f32   uniforms in (0, 1), one per output element
    # out_ref: (TB, C*C)   f32   hard {0,1} sample, lane-dense flattened (C, C)
    TB, C, F = xf_ref.shape

    # ---- pairwise distances on the MXU (Gram-matrix identity) ---------------
    # A @ (x_i - x_j) == (A @ x_i) - (A @ x_j); with y = XF @ A^T:
    #   dist_ij = ||y_i||^2 + ||y_j||^2 - 2 * y_i . y_j     (second MXU matmul)
    xf16 = xf_ref[...].reshape(TB * C, F).astype(jnp.bfloat16)   # fill sublanes
    a16 = a_ref[...].astype(jnp.bfloat16)

    y = lax.dot_general(                       # (TB*C, F) == XF @ A^T, f32 acc
        xf16, a16, (((1,), (1,)), ((), ())),
        preferred_element_type=jnp.float32)
    y16 = y.reshape(TB, C, F).astype(jnp.bfloat16)

    gram = lax.dot_general(                    # (TB, C, C) == y @ y^T per batch
        y16, y16, (((2,), (2,)), ((0,), (0,))),
        preferred_element_type=jnp.float32)

    y32 = y16.astype(jnp.float32)              # same bf16-rounded values as gram
    sq = jnp.sum(y32 * y32, axis=-1)           # (TB, C) squared norms
    # Clamp: catastrophic cancellation can produce tiny negative values.
    dist = jnp.maximum(sq[:, :, None] + sq[:, None, :] - 2.0 * gram, 0.0)

    # ---- probabilities -------------------------------------------------------
    row = lax.broadcasted_iota(jnp.int32, (C, C), 0)
    col = lax.broadcasted_iota(jnp.int32, (C, C), 1)
    is_diag = (row == col)[None]                              # (1, C, C) bool

    exp_dist = jnp.where(is_diag, 0.0, 1.0 / (dist + 1e-10))  # zero diagonal
    exp_max = jnp.max(exp_dist, axis=-1, keepdims=True)       # (TB, C, 1)
    p = jnp.where(is_diag, 1.0, exp_dist / exp_max) * 0.99    # (TB, C, C)

    # ---- hard Bernoulli-Gumbel sample (transcendental-free) -----------------
    # keep <=> log(p/(1-p)) + g0 > log((1-p)/p) + g1   (g0, g1 iid Gumbel)
    #      <=> 2*log(p/(1-p)) > Logistic = log(u/(1-u))
    #      <=> p^2 * (1-u) > u * (1-p)^2                (one uniform, no logs)
    u = u_ref[...]
    q = 1.0 - p
    keep = p * p * (1.0 - u) > u * q * q
    sample = jnp.where(keep, 1.0, 0.0).astype(jnp.float32)

    out_ref[...] = sample.reshape(TB, C * C)                  # lane-dense store


def _batch_tile(B, max_tb=8):
    tb = min(B, max_tb)
    while B % tb:
        tb -= 1
    return tb


def mahalanobis_mask(X, A, seed=0):
    """X: (B, C, L) float32; A: (F, F) with F = L//2 + 1.  Returns (B, 1, C, C)."""
    B, C, L = X.shape
    F = L // 2 + 1
    assert A.shape == (F, F)

    # FFT has no Pallas primitive: |rfft| is plain-JAX glue feeding the kernel.
    XF = jnp.abs(jnp.fft.rfft(X.astype(jnp.float32), axis=-1)).astype(jnp.float32)

    # One uniform per output element, generated outside the kernel so the
    # kernel stays free of the stateful TPU PRNG (no interpret/CPU lowering).
    key = jax.random.PRNGKey(seed)
    U = jax.random.uniform(key, (B, C, C), dtype=jnp.float32,
                           minval=1e-6, maxval=1.0 - 1e-6)

    TB = _batch_tile(B)          # batches per grid step (amortizes step overhead)
    grid = (B // TB,)

    sample_flat = pl.pallas_call(
        _mahalanobis_mask_kernel,
        grid=grid,
        in_specs=[
            pl.BlockSpec((TB, C, F), lambda b: (b, 0, 0)),    # XF batch block
            pl.BlockSpec((F, F), lambda b: (0, 0)),           # A (shared)
            pl.BlockSpec((TB, C, C), lambda b: (b, 0, 0)),    # uniforms
        ],
        out_specs=pl.BlockSpec((TB, C * C), lambda b: (b, 0)),  # lane-dense out
        out_shape=jax.ShapeDtypeStruct((B, C * C), jnp.float32),
        compiler_params=pltpu.CompilerParams(
            dimension_semantics=("parallel",)),               # 2 TCs on v7x
    )(XF, A, U)

    sample = sample_flat.reshape(B, C, C)
    # TODO(synk): `compute_ppr` is undefined in the reference module; treated as identity here.
    return sample[:, None, :, :]


if __name__ == "__main__":
    key = jax.random.PRNGKey(0)
    kx, ka = jax.random.split(key)

    B, C, L = 2, 8, 16           # batch, channels, seq_len (input_size)
    F = L // 2 + 1               # frequency_size = 9

    X = jax.random.normal(kx, (B, C, L), dtype=jnp.float32)
    # Deterministic stand-in for nn.Parameter(torch.randn(F, F))
    A = jax.random.normal(ka, (F, F), dtype=jnp.float32)

    mask = mahalanobis_mask(X, A, seed=0)
    mask = jax.block_until_ready(mask)

    assert mask.shape == (B, 1, C, C), mask.shape
    assert mask.dtype == jnp.float32
    assert bool(jnp.all((mask == 0.0) | (mask == 1.0)))
    print("KERNEL_OK")
</pallas_src>

<mosaic_0001>
module attributes {stable_mosaic.version = 11 : i64} {
  func.func @_mahalanobis_mask_kernel(%arg0: i32, %arg1: memref<2x8x9xf32, #tpu.memory_space<vmem>>, %arg2: memref<9x9xf32, #tpu.memory_space<vmem>>, %arg3: memref<2x8x8xf32, #tpu.memory_space<vmem>>, %arg4: memref<2x64xf32, #tpu.memory_space<vmem>>) attributes {dimension_semantics = [#tpu.dimension_semantics<parallel>], iteration_bounds = array<i64: 1>, scalar_prefetch = 0 : i64, scratch_operands = 0 : i64, tpu.core_type = #tpu.core_type<tc>, window_params = [{transform_indices = @transform_0, window_bounds = array<i64: 2, 8, 9>}, {pipeline_mode = #tpu.pipeline_mode<synchronous>, transform_indices = @transform_1, window_bounds = array<i64: 9, 9>}, {transform_indices = @transform_2, window_bounds = array<i64: 2, 8, 8>}, {transform_indices = @transform_3, window_bounds = array<i64: 2, 64>}]} {
    %c0 = arith.constant 0 : index
    %c0_0 = arith.constant 0 : index
    %c0_1 = arith.constant 0 : index
    %0 = vector.load %arg1[%c0, %c0_0, %c0_1] : memref<2x8x9xf32, #tpu.memory_space<vmem>>, vector<2x8x9xf32>
    %1 = vector.shape_cast %0 : vector<2x8x9xf32> to vector<16x9xf32>
    %2 = arith.truncf %1 : vector<16x9xf32> to vector<16x9xbf16>
    %c0_2 = arith.constant 0 : index
    %c0_3 = arith.constant 0 : index
    %3 = vector.load %arg2[%c0_2, %c0_3] : memref<9x9xf32, #tpu.memory_space<vmem>>, vector<9x9xf32>
    %4 = arith.truncf %3 : vector<9x9xf32> to vector<9x9xbf16>
    %cst = arith.constant dense<0.000000e+00> : vector<16x9xf32>
    %5 = tpu.matmul %2, %4, %cst {dimension_numbers = #tpu.dot_dimension_numbers<[1], [1], [0], [0], [0, 0, 1, 0], [], []>} : vector<16x9xbf16>, vector<9x9xbf16>, vector<16x9xf32> -> vector<16x9xf32>
    %6 = vector.shape_cast %5 : vector<16x9xf32> to vector<2x8x9xf32>
    %7 = arith.truncf %6 : vector<2x8x9xf32> to vector<2x8x9xbf16>
    %cst_4 = arith.constant dense<0.000000e+00> : vector<2x8x8xf32>
    %8 = tpu.matmul %7, %7, %cst_4 {dimension_numbers = #tpu.dot_dimension_numbers<[2], [2], [1], [1], [0, 0, 0, 1, 1, 1], [0], [0]>} : vector<2x8x9xbf16>, vector<2x8x9xbf16>, vector<2x8x8xf32> -> vector<2x8x8xf32>
    %9 = arith.extf %7 : vector<2x8x9xbf16> to vector<2x8x9xf32>
    %10 = arith.mulf %9, %9 : vector<2x8x9xf32>
    %cst_5 = arith.constant dense<0.000000e+00> : vector<2x8xf32>
    %11 = vector.multi_reduction <add>, %10, %cst_5 [2] : vector<2x8x9xf32> to vector<2x8xf32>
    %12 = vector.shape_cast %11 : vector<2x8xf32> to vector<2x8x1xf32>
    %13 = vector.shape_cast %11 : vector<2x8xf32> to vector<2x1x8xf32>
    %14 = vector.broadcast %12 : vector<2x8x1xf32> to vector<2x8x8xf32>
    %15 = vector.broadcast %13 : vector<2x1x8xf32> to vector<2x8x8xf32>
    %16 = arith.addf %14, %15 : vector<2x8x8xf32>
    %cst_6 = arith.constant 2.000000e+00 : f32
    %17 = vector.broadcast %cst_6 : f32 to vector<2x8x8xf32>
    %18 = arith.mulf %17, %8 : vector<2x8x8xf32>
    %19 = arith.subf %16, %18 : vector<2x8x8xf32>
    %cst_7 = arith.constant 0.000000e+00 : f32
    %20 = vector.broadcast %cst_7 : f32 to vector<2x8x8xf32>
    %21 = arith.maximumf %19, %20 : vector<2x8x8xf32>
    %22 = tpu.iota {dimensions = array<i32: 0>} : vector<8x8xi32>
    %23 = tpu.iota {dimensions = array<i32: 1>} : vector<8x8xi32>
    %24 = arith.cmpi eq, %22, %23 : vector<8x8xi32>
    %25 = vector.shape_cast %24 : vector<8x8xi1> to vector<1x8x8xi1>
    %cst_8 = arith.constant 1.000000e-10 : f32
    %26 = vector.broadcast %cst_8 : f32 to vector<2x8x8xf32>
    %27 = arith.addf %21, %26 : vector<2x8x8xf32>
    %cst_9 = arith.constant 1.000000e+00 : f32
    %28 = vector.broadcast %cst_9 : f32 to vector<2x8x8xf32>
    %29 = arith.divf %28, %27 : vector<2x8x8xf32>
    %cst_10 = arith.constant 0.000000e+00 : f32
    %30 = vector.shape_cast %25 : vector<1x8x8xi1> to vector<1x8x8xi1>
    %31 = vector.broadcast %30 : vector<1x8x8xi1> to vector<2x8x8xi1>
    %32 = vector.broadcast %cst_10 : f32 to vector<2x8x8xf32>
    %33 = arith.select %31, %32, %29 : vector<2x8x8xi1>, vector<2x8x8xf32>
    %cst_11 = arith.constant dense<0xFF800000> : vector<2x8xf32>
    %34 = vector.multi_reduction <maximumf>, %33, %cst_11 [2] : vector<2x8x8xf32> to vector<2x8xf32>
    %35 = vector.shape_cast %34 : vector<2x8xf32> to vector<2x8x1xf32>
    %36 = vector.broadcast %35 : vector<2x8x1xf32> to vector<2x8x8xf32>
    %37 = arith.divf %33, %36 : vector<2x8x8xf32>
    %cst_12 = arith.constant 1.000000e+00 : f32
    %38 = vector.shape_cast %25 : vector<1x8x8xi1> to vector<1x8x8xi1>
    %39 = vector.broadcast %38 : vector<1x8x8xi1> to vector<2x8x8xi1>
    %40 = vector.broadcast %cst_12 : f32 to vector<2x8x8xf32>
    %41 = arith.select %39, %40, %37 : vector<2x8x8xi1>, vector<2x8x8xf32>
    %cst_13 = arith.constant 9.900000e-01 : f32
    %42 = vector.broadcast %cst_13 : f32 to vector<2x8x8xf32>
    %43 = arith.mulf %41, %42 : vector<2x8x8xf32>
    %c0_14 = arith.constant 0 : index
    %c0_15 = arith.constant 0 : index
    %c0_16 = arith.constant 0 : index
    %44 = vector.load %arg3[%c0_14, %c0_15, %c0_16] : memref<2x8x8xf32, #tpu.memory_space<vmem>>, vector<2x8x8xf32>
    %cst_17 = arith.constant 1.000000e+00 : f32
    %45 = vector.broadcast %cst_17 : f32 to vector<2x8x8xf32>
    %46 = arith.subf %45, %43 : vector<2x8x8xf32>
    %47 = arith.mulf %43, %43 : vector<2x8x8xf32>
    %cst_18 = arith.constant 1.000000e+00 : f32
    %48 = vector.broadcast %cst_18 : f32 to vector<2x8x8xf32>
    %49 = arith.subf %48, %44 : vector<2x8x8xf32>
    %50 = arith.mulf %47, %49 : vector<2x8x8xf32>
    %51 = arith.mulf %44, %46 : vector<2x8x8xf32>
    %52 = arith.mulf %51, %46 : vector<2x8x8xf32>
    %53 = arith.cmpf ogt, %50, %52 : vector<2x8x8xf32>
    %cst_19 = arith.constant 1.000000e+00 : f32
    %cst_20 = arith.constant 0.000000e+00 : f32
    %54 = vector.broadcast %cst_19 : f32 to vector<2x8x8xf32>
    %55 = vector.broadcast %cst_20 : f32 to vector<2x8x8xf32>
    %56 = arith.select %53, %54, %55 : vector<2x8x8xi1>, vector<2x8x8xf32>
    %57 = vector.shape_cast %56 : vector<2x8x8xf32> to vector<2x64xf32>
    %c0_21 = arith.constant 0 : index
    %c0_22 = arith.constant 0 : index
    %58 = vector.load %arg4[%c0_21, %c0_22] : memref<2x64xf32, #tpu.memory_space<vmem>>, vector<2x64xf32>
    tpu.vector_store %arg4[%c0_21, %c0_22], %57 {strides = array<i32>} : memref<2x64xf32, #tpu.memory_space<vmem>>, vector<2x64xf32>,
    return
  }
  func.func @transform_0(%arg0: i32) -> (i32, i32, i32) {
    %c0_i32 = arith.constant 0 : i32
    %c0_i32_0 = arith.constant 0 : i32
    %c0_i32_1 = arith.constant 0 : i32
    return %arg0, %c0_i32, %c0_i32_0 : i32, i32, i32
  }
  func.func @transform_1(%arg0: i32) -> (i32, i32) {
    %c0_i32 = arith.constant 0 : i32
    %c0_i32_0 = arith.constant 0 : i32
    %c0_i32_1 = arith.constant 0 : i32
    return %c0_i32, %c0_i32_0 : i32, i32
  }
  func.func @transform_2(%arg0: i32) -> (i32, i32, i32) {
    %c0_i32 = arith.constant 0 : i32
    %c0_i32_0 = arith.constant 0 : i32
    %c0_i32_1 = arith.constant 0 : i32
    return %arg0, %c0_i32, %c0_i32_0 : i32, i32, i32
  }
  func.func @transform_3(%arg0: i32) -> (i32, i32) {
    %c0_i32 = arith.constant 0 : i32
    %c0_i32_0 = arith.constant 0 : i32
    return %arg0, %c0_i32 : i32, i32
  }
}

</mosaic_0001>

<llo_original>
// kernel: tpu_custom_call.1
$region0: #{tpu_custom_call.1}
  #allocation0 [shape = 'u32[]', space=smem, size = 0x4, offset = 0x4, fixed_abs, tag = 'smem constant byte address 0x4 - core index']
  #allocation1 [shape = 'u32[72,128]{1,0:T(1,128)}', space=vmem, size = 0x9000, scoped, tag = 'internal scratch']
  %s0 = inlined_call_operand.hbm [shape: f32[2,8,9], index: 0, kind: input, shape index: {}]
  %s1 = inlined_call_operand.hbm [shape: f32[9,9], index: 1, kind: input, shape index: {}]
  %s2 = inlined_call_operand.hbm [shape: f32[2,8,8], index: 2, kind: input, shape index: {}]
  %s3 = inlined_call_operand.hbm [shape: f32[2,64], index: 3, kind: output, shape index: {}]
  %s4 = sld [smem:[#allocation0]]
  $region34: #{tpu_custom_call.1} parent=0
    _
  %s6 = ssub.s32 1, %s4
  %s7 = scalar_select 0, %s6, %s4
  $region1: #{tpu_custom_call.1} parent=0
    #allocation2 [shape = 'u8[8192]{0}', space=vmem, size = 0x2000, scoped, tag = 'input window, operand 0, single buffered']
    #allocation3 [shape = 's32[1]{0}', space=sflag, size = 0x4, scoped, tag = 'scoped memory for tpu_custom_call.1']
    #allocation4 [shape = 's32[1]{0}', space=sflag, size = 0x4, scoped, tag = 'scoped memory for tpu_custom_call.1']
    #allocation5 [shape = 'u8[8192]{0}', space=vmem, size = 0x2000, scoped, tag = 'input window, operand 1, single buffered']
    #allocation6 [shape = 's32[1]{0}', space=sflag, size = 0x4, scoped, tag = 'scoped memory for tpu_custom_call.1']
    #allocation7 [shape = 'u8[8192]{0}', space=vmem, size = 0x2000, scoped, tag = 'input window, operand 2, single buffered']
    #allocation8 [shape = 'u8[1024]{0}', space=vmem, size = 0x400, scoped, tag = 'output window, operand 0, single buffered']
    %8 = vsyncpa [#allocation3], 0
    %9 = vsyncpa [#allocation6], 0
    %10 = vsyncpa [#allocation4], 0
    // Predicated region
    $region2: #{tpu_custom_call.1} parent=1 // pred_check
      _
    $region3: #{tpu_custom_call.1} parent=1 // pred_check_branch
      %12 = sbr.rel (0) target = $region5
    $region4: #{tpu_custom_call.1} parent=1 // pred_region
      %14 = vsyncadd [#allocation3], 0
      %s15 = sshll.u32 %s0, 4
      %s16 = int_to_ptr.hbm [resolvable:$true] %s15
      %s17 = sshll.u32 [#allocation2], 4
      %s18 = int_to_ptr.vmem [resolvable:$true] %s17
      %23 = dma.hbm_to_vmem [thread:$0]  %s16, 256, %s18, [#allocation3], 128, 128, 8
    $region5: #{tpu_custom_call.1} parent=1 // pred_fallthru
      _
    // Predicated region
    $region6: #{tpu_custom_call.1} parent=1 // pred_check
      _
    $region7: #{tpu_custom_call.1} parent=1 // pred_check_branch
      %25 = sbr.rel (0) target = $region9
    $region8: #{tpu_custom_call.1} parent=1 // pred_region
      %27 = vsyncadd [#allocation6], 0
      %s28 = sshll.u32 %s1, 4
      %s29 = int_to_ptr.hbm [resolvable:$true] %s28
      %s30 = sshll.u32 [#allocation5], 4
      %s31 = int_to_ptr.vmem [resolvable:$true] %s30
      %36 = dma.hbm_to_vmem [thread:$0]  %s29, 256, %s31, [#allocation6], 128, 128, 8
    $region9: #{tpu_custom_call.1} parent=1 // pred_fallthru
      _
    // Predicated region
    $region10: #{tpu_custom_call.1} parent=1 // pred_check
      _
    $region11: #{tpu_custom_call.1} parent=1 // pred_check_branch
      %38 = sbr.rel (0) target = $region13
    $region12: #{tpu_custom_call.1} parent=1 // pred_region
      %40 = vsyncadd [#allocation6], 0
      %s41 = sshll.u32 %s2, 4
      %s42 = int_to_ptr.hbm [resolvable:$true] %s41
      %s43 = sshll.u32 [#allocation7], 4
      %s44 = int_to_ptr.vmem [resolvable:$true] %s43
      %49 = dma.hbm_to_vmem [thread:$0]  %s42, 256, %s44, [#allocation6], 128, 128, 8
    $region13: #{tpu_custom_call.1} parent=1 // pred_fallthru
      _
    // Predicated region
    $region14: #{tpu_custom_call.1} parent=1 // pred_check
      _
    $region15: #{tpu_custom_call.1} parent=1 // pred_check_branch
      %51 = sbr.rel (0) target = $region17
    $region16: #{tpu_custom_call.1} parent=1 // pred_region
      %53 = dma.done [#allocation3], 256
    $region17: #{tpu_custom_call.1} parent=1 // pred_fallthru
      _
    // Predicated region
    $region18: #{tpu_custom_call.1} parent=1 // pred_check
      _
    $region19: #{tpu_custom_call.1} parent=1 // pred_check_branch
      %55 = sbr.rel (0) target = $region21
    $region20: #{tpu_custom_call.1} parent=1 // pred_region
      %57 = dma.done [#allocation6], 256
    $region21: #{tpu_custom_call.1} parent=1 // pred_fallthru
      _
    // Predicated region
    $region22: #{tpu_custom_call.1} parent=1 // pred_check
      _
    $region23: #{tpu_custom_call.1} parent=1 // pred_check_branch
      %59 = sbr.rel (0) target = $region25
    $region24: #{tpu_custom_call.1} parent=1 // pred_region
      %61 = dma.done [#allocation6], 256
    $region25: #{tpu_custom_call.1} parent=1 // pred_fallthru
      _
    %v63 = vld [vmem:[#allocation2] sm:$0xff]
    %v64 = vld [vmem:[#allocation2 + $0x8] sm:$0xff]
    %v65 = vpack.c.bf16 %v64, %v63
    %v66 = vld [vmem:[#allocation5] sm:$0xff]
    %v67 = vld [vmem:[#allocation5 + $0x8] sm:$0x1]
    %v68 = vpack.c.bf16 %v67, %v66
    %vm69 = vcmask 72704
    %v71 = vsel %vm69, %v65, 0
    %v74 = vsel %vm69, %v68, 0
    %76 = vmatpush.bf16.xpose.msra.mxu0 0
    %77 = vmatpush.bf16.xpose.msra.mxu0 0
    %78 = vmatpush.bf16.xpose.msra.mxu0 0
    %79 = vmatpush.bf16.xpose.msra.mxu0 0
    %80 = vmatpush.bf16.xpose.msra.mxu0 0
    %81 = vmatpush.bf16.xpose.msra.mxu0 0
    %82 = vmatpush.bf16.xpose.msra.mxu0 0
    %83 = vmatpush.bf16.xpose.msra.mxu0 %v74
    %84 = vmatmul.bf16.gmra.mxu0 %v71
    %v85 = vpop.f32.mrf.mxu0
    %v86 = vadd.f32 0.0, %v85
    %v87 = vpop.f32.mrf.mxu0
    %v88 = vadd.f32 0.0, %v87
    %89 = vdwg.mxu0
    %v90 = vpack.c.bf16 %v86, %v86
    %v91 = vpack.c.bf16 %v88, %v88
    %v93 = vsel %vm69, %v90, 0
    %95 = vmatpush.bf16.xpose.msra.mxu0 0
    %96 = vmatpush.bf16.xpose.msra.mxu0 0
    %97 = vmatpush.bf16.xpose.msra.mxu0 0
    %98 = vmatpush.bf16.xpose.msra.mxu0 0
    %99 = vmatpush.bf16.xpose.msra.mxu0 0
    %100 = vmatpush.bf16.xpose.msra.mxu0 0
    %101 = vmatpush.bf16.xpose.msra.mxu0 0
    %102 = vmatpush.bf16.xpose.msra.mxu0 %v93
    %103 = vmatmul.bf16.gmra.mxu0 %v93
    %v104 = vpop.f32.mrf.mxu0
    %v105 = vadd.f32 0.0, %v104
    %v106 = vpop.f32.mrf.mxu0
    %107 = vdwg.mxu0
    %v109 = vsel %vm69, %v91, 0
    %111 = vmatpush.bf16.xpose.msra.mxu0 0
    %112 = vmatpush.bf16.xpose.msra.mxu0 0
    %113 = vmatpush.bf16.xpose.msra.mxu0 0
    %114 = vmatpush.bf16.xpose.msra.mxu0 0
    %115 = vmatpush.bf16.xpose.msra.mxu0 0
    %116 = vmatpush.bf16.xpose.msra.mxu0 0
    %117 = vmatpush.bf16.xpose.msra.mxu0 0
    %118 = vmatpush.bf16.xpose.msra.mxu0 %v109
    %119 = vmatmul.bf16.gmra.mxu0 %v109
    %v120 = vpop.f32.mrf.mxu0
    %v121 = vadd.f32 0.0, %v120
    %v122 = vpop.f32.mrf.mxu0
    %123 = vdwg.mxu0
    %v124 = vunpack.c.l.bf16 %v90
    %v125 = vunpack.c.l.bf16 %v91
    %v126 = vmul.f32 %v124, %v124
    %v127 = vmul.f32 %v125, %v125
    %v128 = vsel %vm69, %v126, 0.0
    %129 = vadd.xlane.f32.xlu0 %v128
    %v130 = vpop.xlane.xlu0 %129
    %v131 = vsel %vm69, %v127, 0.0
    %132 = vadd.xlane.f32.xlu0 %v131
    %v133 = vpop.xlane.xlu0 %132
    %v136 = vlaneseq
    %v137 = vand.u32 %v136, 127
    %v138 = vperm.slane %v130, %v137
    %v139 = vperm.slane %v133, %v137
    %vm140 = vcmask 1042434
    %v141 = vsel %vm140, %v138, %v138
    %vm142 = vcmask 1043459
    %v143 = vsel %vm142, %v138, %v141
    %vm144 = vcmask 1044484
    %v145 = vsel %vm144, %v138, %v143
    %vm146 = vcmask 1045509
    %v147 = vsel %vm146, %v138, %v145
    %vm148 = vcmask 1046534
    %v149 = vsel %vm148, %v138, %v147
    %vm150 = vcmask 1047559
    %v151 = vsel %vm150, %v138, %v149
    %v152 = vsel %vm140, %v139, %v139
    %v153 = vsel %vm142, %v139, %v152
    %v154 = vsel %vm144, %v139, %v153
    %v155 = vsel %vm146, %v139, %v154
    %v156 = vsel %vm148, %v139, %v155
    %v157 = vsel %vm150, %v139, %v156
    %v160 = vadd.f32 %v130, %v151
    %v161 = vadd.f32 %v133, %v157
    %v162 = vmul.f32 %v105, 2.0
    %v163 = vmul.f32 %v121, 2.0
    %v164 = vsub.f32 %v160, %v162
    %v165 = vsub.f32 %v161, %v163
    %v166 = vmax.f32 %v164, 0.0
    %v167 = vmax.f32 %v165, 0.0
    %v168 = vlaneseq
    %v169 = vshrl.u32 %v168, 7
    %vm170 = vcmp.eq.s32.totalorder %v169, %v137
    %v171 = vadd.f32 %v166, 1e-10
    %v172 = vadd.f32 %v167, 1e-10
    %v173 = vrcp.pop %v171
    %v174 = vmul.f32 %v171, %v173
    %v175 = vsub.f32 1.0, %v174
    %v176 = vmul.f32 %v173, %v175
    %v177 = vadd.f32 %v173, %v176
    %vm178 = vweird.f32 %v171
    %vm179 = vweird.f32 %v173
    %vm180 = vmor %vm178, %vm179
    %v181 = vsel %vm180, %v173, %v177
    %v182 = vand.u32 2147483647, %v171
    %vm183 = vcmp.eq.f32.partialorder %v182, 8.507059e+37
    %v184 = vand.u32 %v171, 2147483648
    %v185 = vor.u32 1.1754944e-38, %v184
    %v186 = vsel %vm183, %v185, %v181
    %v187 = vmul.f32 1.0, %v186
    %v188 = vrcp.pop %v172
    %v189 = vmul.f32 %v172, %v188
    %v190 = vsub.f32 1.0, %v189
    %v191 = vmul.f32 %v188, %v190
    %v192 = vadd.f32 %v188, %v191
    %vm193 = vweird.f32 %v172
    %vm194 = vweird.f32 %v188
    %vm195 = vmor %vm193, %vm194
    %v196 = vsel %vm195, %v188, %v192
    %v197 = vand.u32 2147483647, %v172
    %vm198 = vcmp.eq.f32.partialorder %v197, 8.507059e+37
    %v199 = vand.u32 %v172, 2147483648
    %v200 = vor.u32 1.1754944e-38, %v199
    %v201 = vsel %vm198, %v200, %v196
    %v202 = vmul.f32 1.0, %v201
    %v203 = vsel %vm170, 1, 0
    %vm204 = vcmp.eq.s32.totalorder %v203, 1
    %v205 = vsel %vm204, 0.0, %v187
    %v206 = vsel %vm204, 0.0, %v202
    %vm207 = vcmask 64512
    %v208 = vsel %vm207, %v205, -inf
    %209 = vmax.xlane.f32.xlu0 %v208
    %v210 = vpop.xlane.xlu0 %209
    %v211 = vsel %vm207, %v206, -inf
    %212 = vmax.xlane.f32.xlu0 %v211
    %v213 = vpop.xlane.xlu0 %212
    %v214 = vrcp.pop %v210
    %v215 = vmul.f32 %v210, %v214
    %v216 = vsub.f32 1.0, %v215
    %v217 = vmul.f32 %v214, %v216
    %v218 = vadd.f32 %v214, %v217
    %vm219 = vweird.f32 %v210
    %vm220 = vweird.f32 %v214
    %vm221 = vmor %vm219, %vm220
    %v222 = vsel %vm221, %v214, %v218
    %v223 = vand.u32 2147483647, %v210
    %vm224 = vcmp.eq.f32.partialorder %v223, 8.507059e+37
    %v225 = vand.u32 %v210, 2147483648
    %v226 = vor.u32 1.1754944e-38, %v225
    %v227 = vsel %vm224, %v226, %v222
    %v228 = vmul.f32 %v205, %v227
    %v229 = vrcp.pop %v213
    %v230 = vmul.f32 %v213, %v229
    %v231 = vsub.f32 1.0, %v230
    %v232 = vmul.f32 %v229, %v231
    %v233 = vadd.f32 %v229, %v232
    %vm234 = vweird.f32 %v213
    %vm235 = vweird.f32 %v229
    %vm236 = vmor %vm234, %vm235
    %v237 = vsel %vm236, %v229, %v233
    %v238 = vand.u32 2147483647, %v213
    %vm239 = vcmp.eq.f32.partialorder %v238, 8.507059e+37
    %v240 = vand.u32 %v213, 2147483648
    %v241 = vor.u32 1.1754944e-38, %v240
    %v242 = vsel %vm239, %v241, %v237
    %v243 = vmul.f32 %v206, %v242
    %v244 = vsel %vm204, 1.0, %v228
    %v245 = vsel %vm204, 1.0, %v243
    %v246 = vmul.f32 %v244, 0.99
    %v247 = vmul.f32 %v245, 0.99
    %v248 = vld [vmem:[#allocation7] sm:$0xff]
    %v249 = vld [vmem:[#allocation7 + $0x8] sm:$0xff]
    %v250 = vsub.f32 1.0, %v246
    %v251 = vsub.f32 1.0, %v247
    %v252 = vmul.f32 %v246, %v246
    %v253 = vmul.f32 %v247, %v247
    %v254 = vsub.f32 1.0, %v248
    %v255 = vsub.f32 1.0, %v249
    %v256 = vmul.f32 %v252, %v254
    %v257 = vmul.f32 %v253, %v255
    %v258 = vmul.f32 %v248, %v250
    %v259 = vmul.f32 %v249, %v251
    %v260 = vmul.f32 %v258, %v250
    %v261 = vmul.f32 %v259, %v251
    %vm262 = vcmp.gt.f32.partialorder %v256, %v260
    %vm263 = vcmp.gt.f32.partialorder %v257, %v261
    %v264 = vsel %vm262, 1.0, 0.0
    %v265 = vsel %vm263, 1.0, 0.0
    %v266 = vrot.slane %v264, 4
    %vm267 = vcmask 1047556
    %v268 = vsel %vm267, 0.0, %v266
    %v270 = vunpack.c.l.s4 1983009808
    %v271 = vunpack.c.0.s8 %v270
    %v272 = vperm.slane %v264, %v271
    %v274 = vunpack.c.l.s4 1983009808
    %v275 = vunpack.c.0.s8 %v274
    %v276 = vperm.slane %v268, %v275
    %v277 = vrot.slane %v265, 4
    %v278 = vsel %vm267, 0.0, %v277
    %v280 = vunpack.c.l.s4 1983009808
    %v281 = vunpack.c.0.s8 %v280
    %v282 = vperm.slane %v265, %v281
    %v284 = vunpack.c.l.s4 1983009808
    %v285 = vunpack.c.0.s8 %v284
    %v286 = vperm.slane %v278, %v285
    %v287 = vrot.slane %v282, 4
    %v288 = vsel %vm267, %v287, %v272
    %v289 = vrot.slane %v272, 4
    %v290 = vsel %vm267, %v282, %v289
    %v292 = vunpack.c.l.s4 1934713408
    %v293 = vunpack.c.0.s8 %v292
    %v294 = vperm.slane %v288, %v293
    %v296 = vunpack.c.l.s4 1934713408
    %v297 = vunpack.c.0.s8 %v296
    %v298 = vperm.slane %v290, %v297
    %v299 = vrot.slane %v286, 4
    %v300 = vsel %vm267, %v299, %v276
    %v301 = vrot.slane %v276, 4
    %v302 = vsel %vm267, %v286, %v301
    %v304 = vunpack.c.l.s4 1934713408
    %v305 = vunpack.c.0.s8 %v304
    %v306 = vperm.slane %v300, %v305
    %v308 = vunpack.c.l.s4 1934713408
    %v309 = vunpack.c.0.s8 %v308
    %v310 = vperm.slane %v302, %v309
    %v311 = vrot.slane %v294, 4
    %v312 = vsel %vm267, 0.0, %v311
    %v313 = vrot.slane %v298, 4
    %v314 = vsel %vm267, 0.0, %v313
    %v315 = vrot.slane %v306, 4
    %v316 = vsel %vm267, 0.0, %v315
    %v317 = vrot.slane %v310, 4
    %v318 = vsel %vm267, 0.0, %v317
    %320 = vrot.lane.b32.xlu0 %v312, 8
    %v321 = vpop.permute.xlu0 %320
    %324 = vrot.lane.b32.xlu0 %v298, 16
    %v325 = vpop.permute.xlu0 %324
    %328 = vrot.lane.b32.xlu0 %v314, 24
    %v329 = vpop.permute.xlu0 %328
    %332 = vrot.lane.b32.xlu0 %v306, 32
    %v333 = vpop.permute.xlu0 %332
    %336 = vrot.lane.b32.xlu0 %v316, 40
    %v337 = vpop.permute.xlu0 %336
    %340 = vrot.lane.b32.xlu0 %v310, 48
    %v341 = vpop.permute.xlu0 %340
    %344 = vrot.lane.b32.xlu0 %v318, 56
    %v345 = vpop.permute.xlu0 %344
    %v347 = vsel %vm207, %v294, %v321
    %vm348 = vcmask 130048
    %v349 = vsel %vm348, %v347, %v325
    %vm350 = vcmask 195584
    %v351 = vsel %vm350, %v349, %v329
    %vm352 = vcmask 261120
    %v353 = vsel %vm352, %v351, %v333
    %vm354 = vcmask 326656
    %v355 = vsel %vm354, %v353, %v337
    %vm356 = vcmask 392192
    %v357 = vsel %vm356, %v355, %v341
    %vm358 = vcmask 457728
    %v359 = vsel %vm358, %v357, %v345
    %vm360 = vcmask 517120
    %361 = vst.msk [vmem:[#allocation8] sm:$0x3] %vm360, %v359
    // Predicated region
    $region26: #{tpu_custom_call.1} parent=1 // pred_check
      _
    $region27: #{tpu_custom_call.1} parent=1 // pred_check_branch
      %363 = sbr.rel (0) target = $region29
    $region28: #{tpu_custom_call.1} parent=1 // pred_region
      %365 = vsyncadd [#allocation4], 0
      %s367 = sshll.u32 [#allocation8], 4
      %s368 = int_to_ptr.vmem [resolvable:$true] %s367
      %s369 = sshll.u32 %s3, 4
      %s370 = int_to_ptr.hbm [resolvable:$true] %s369
      %372 = dma.vmem_to_hbm [thread:$0]  %s368, 32, %s370, [#allocation4]
    $region29: #{tpu_custom_call.1} parent=1 // pred_fallthru
      _
    // Predicated region
    $region30: #{tpu_custom_call.1} parent=1 // pred_check
      _
    $region31: #{tpu_custom_call.1} parent=1 // pred_check_branch
      %374 = sbr.rel (0) target = $region33
    $region32: #{tpu_custom_call.1} parent=1 // pred_region
      %376 = dma.done [#allocation4], 32
    $region33: #{tpu_custom_call.1} parent=1 // pred_fallthru
      _
    %377 = vsyncpa [#allocation3], 1
    %378 = vsyncpa [#allocation6], 1
    %379 = vsyncpa [#allocation4], 1

</llo_original>
